<compile_context>
chip_gen: v5e
topology: v5e:2x2
jax: 0.10.0
libtpu: 0.0.40
codegen_flags: <defaults>
</compile_context>

<pallas_src>
import functools

import jax
import jax.numpy as jnp
from jax.experimental import pallas as pl
from jax.experimental.pallas import tpu as pltpu


def _rmsnorm_kernel(x_ref, w_ref, o_ref, *, eps, true_d, native_lowp):
    # x_ref: (ROW_TILE, D)   w_ref: (1, D)   o_ref: (ROW_TILE, D)
    x = x_ref[...]
    xf = x.astype(jnp.float32)
    # Sum of squares over the full (un-padded) last axis, accumulated in f32.
    ssq = jnp.sum(xf * xf, axis=-1, keepdims=True)
    inv = jax.lax.rsqrt(ssq * (1.0 / true_d) + eps)          # (R, 1) f32, EUP
    if native_lowp and o_ref.dtype != jnp.float32:
        # v6e/v7x low-precision path: weight already in the native dtype,
        # only the (R,1) rsqrt factor is cast (native bf16 VALUs do the rest).
        o_ref[...] = (x * w_ref[...]) * inv.astype(o_ref.dtype)
    else:
        # f32 path, and the v5e low-precision path (f32-only VALUs):
        # keep the math in f32, cast once at the store. w_ref is f32 here.
        o_ref[...] = (xf * (inv * w_ref[...])).astype(o_ref.dtype)


def _vmem_capacity_bytes():
    try:
        return int(pltpu.get_tpu_info().vmem_capacity_bytes)
    except Exception:
        return 64 << 20  # conservative fallback (v7x per-TC size)


def _has_native_lowp_vpu():
    # v6e (Trillium) and later have native bf16 VALUs; v5e/v5p/v4/... do not.
    try:
        kind = jax.devices()[0].device_kind.lower()
    except Exception:
        return True
    return not any(tag in kind for tag in ("v2", "v3", "v4", "v5"))


def _pick_row_tile(rows, d, itemsize, vmem_bytes):
    # dtype-aware sublane packing: f32 -> 8, bf16 -> 16, int8/fp8 -> 32
    sublane = {4: 8, 2: 16, 1: 32}.get(itemsize, 8)
    # VMEM per row of tile: (in + out) x double buffer.
    per_row = d * itemsize * 2 * 2
    # Conservative budget: even if vmem_capacity_bytes reports per-chip on a
    # 2-TC part, 48 MiB of in/out buffers stays under a 64 MiB per-TC VMEM.
    budget = min(int(vmem_bytes * 0.4), 48 << 20)
    max_rows = max(sublane, (budget // max(per_row, 1)) // sublane * sublane)
    # 256-512 rows hits ~85% of HBM roofline; bigger tiles buy ~1% but shrink
    # the grid (worse 2-TC balance, less VMEM headroom).
    row_tile = min(max_rows, 512)
    # Prefer >= 4 grid steps for megacore load balance, but only when each
    # step still processes a healthy number of rows.
    if rows >= 4 * 256:
        cap = max(256, (rows // 4) // sublane * sublane)
        row_tile = min(row_tile, cap)
    # Tiny inputs: one (possibly partial) step; per-step overhead (~0.35 us)
    # would dominate a pointless split.
    row_tile = min(row_tile, max(sublane, pl.cdiv(rows, sublane) * sublane))
    return max(sublane, (row_tile // sublane) * sublane)


def rmsnorm(x, weight, eps=1e-5):
    """RMSNorm over the last axis of x, scaled by `weight` (shape (D,))."""
    orig_shape = x.shape
    D = orig_shape[-1]
    rows = 1
    for s in orig_shape[:-1]:
        rows *= s

    x2d = x.reshape(rows, D)

    native_lowp = (x.dtype != jnp.float32) and _has_native_lowp_vpu()
    w_dtype = x.dtype if native_lowp else jnp.float32
    w2d = weight.reshape(1, D).astype(w_dtype)   # pre-cast once, outside the grid

    itemsize = jnp.dtype(x.dtype).itemsize
    vmem_cap = _vmem_capacity_bytes()
    row_tile = _pick_row_tile(rows, D, itemsize, vmem_cap)

    grid = (pl.cdiv(rows, row_tile),)   # tail block may be partial; no row pad

    # Raise the scoped VMEM limit to cover the chosen tile; stay below the
    # smallest per-TC physical VMEM (64 MiB on v7x).
    needed = 2 * 2 * row_tile * D * itemsize + 2 * D * 4
    vmem_limit = int(min(64 << 20, max(int(needed * 1.25), 32 << 20)))

    kernel = functools.partial(_rmsnorm_kernel, eps=eps, true_d=D,
                               native_lowp=native_lowp)

    out2d = pl.pallas_call(
        kernel,
        out_shape=jax.ShapeDtypeStruct((rows, D), x.dtype),
        grid_spec=pltpu.PrefetchScalarGridSpec(
            num_scalar_prefetch=0,
            grid=grid,
            in_specs=[
                pl.BlockSpec((row_tile, D), lambda i: (i, 0)),  # x row-tile
                pl.BlockSpec((1, D), lambda i: (0, 0)),         # weight (resident)
            ],
            out_specs=pl.BlockSpec((row_tile, D), lambda i: (i, 0)),
        ),
        compiler_params=pltpu.CompilerParams(
            dimension_semantics=("parallel",),
            vmem_limit_bytes=vmem_limit,
        ),
    )(x2d, w2d)

    return out2d.reshape(orig_shape)


def rmsnorm_ref(x, weight, eps=1e-5):
    xf = x.astype(jnp.float32)
    means = jnp.mean(xf * xf, axis=-1, keepdims=True)
    x_norm = xf * jax.lax.rsqrt(means + eps)
    return (x_norm * weight.astype(jnp.float32)).astype(x.dtype)


if __name__ == "__main__":
    # Small shapes consistent with the module: batch=2, seq=8, emb_dim=32
    B, T, D = 2, 8, 32
    key = jax.random.PRNGKey(0)
    x = jax.random.normal(key, (B, T, D), dtype=jnp.float32)

    # Deterministic parameter init matching nn.Parameter(torch.ones(emb_dim))
    weight = jnp.ones((D,), dtype=jnp.float32)

    out = jax.block_until_ready(rmsnorm(x, weight, eps=1e-5))
    ref = rmsnorm_ref(x, weight, eps=1e-5)
    assert out.shape == x.shape and out.dtype == x.dtype
    assert jnp.allclose(out, ref, atol=1e-5, rtol=1e-5), "f32 mismatch vs reference"

    # Unaligned rows (rows % 8 != 0) -> exercises the partial tail block path.
    x2 = jax.random.normal(jax.random.PRNGKey(1), (3, 5, D), dtype=jnp.float32)
    out2 = jax.block_until_ready(rmsnorm(x2, weight))
    assert jnp.allclose(out2, rmsnorm_ref(x2, weight), atol=1e-5, rtol=1e-5), \
        "unaligned-rows mismatch vs reference"
    assert bool(jnp.all(jnp.isfinite(out2))), "NaN/Inf leaked into valid rows"

    # Low-precision (bf16) path with D not a multiple of 128 and odd rows.
    D3 = 96
    w3 = (jnp.arange(D3, dtype=jnp.float32) % 3 + 1.0) * 0.5
    x3 = jax.random.normal(jax.random.PRNGKey(2), (4, 7, D3), dtype=jnp.bfloat16)
    out3 = jax.block_until_ready(rmsnorm(x3, w3))
    ref3 = rmsnorm_ref(x3, w3)
    assert out3.shape == x3.shape and out3.dtype == jnp.bfloat16
    assert jnp.allclose(out3.astype(jnp.float32), ref3.astype(jnp.float32),
                        atol=3e-2, rtol=3e-2), "bf16 mismatch vs reference"

    print("KERNEL_OK")
</pallas_src>

<mosaic_0001>
module attributes {stable_mosaic.version = 11 : i64} {
  func.func @_rmsnorm_kernel(%arg0: i32, %arg1: memref<16x32xf32, #tpu.memory_space<vmem>>, %arg2: memref<1x32xf32, #tpu.memory_space<vmem>>, %arg3: memref<16x32xf32, #tpu.memory_space<vmem>>) attributes {dimension_semantics = [#tpu.dimension_semantics<parallel>], iteration_bounds = array<i64: 1>, scalar_prefetch = 0 : i64, scratch_operands = 0 : i64, tpu.core_type = #tpu.core_type<tc>, window_params = [{transform_indices = @transform_0, window_bounds = array<i64: 16, 32>}, {pipeline_mode = #tpu.pipeline_mode<synchronous>, transform_indices = @transform_1, window_bounds = array<i64: 1, 32>}, {transform_indices = @transform_2, window_bounds = array<i64: 16, 32>}]} {
    %c0 = arith.constant 0 : index
    %c0_0 = arith.constant 0 : index
    %0 = vector.load %arg1[%c0, %c0_0] : memref<16x32xf32, #tpu.memory_space<vmem>>, vector<16x32xf32>
    %1 = arith.mulf %0, %0 : vector<16x32xf32>
    %cst = arith.constant dense<0.000000e+00> : vector<16xf32>
    %2 = vector.multi_reduction <add>, %1, %cst [1] : vector<16x32xf32> to vector<16xf32>
    %3 = vector.shape_cast %2 : vector<16xf32> to vector<16x1xf32>
    %cst_1 = arith.constant 3.125000e-02 : f32
    %4 = vector.broadcast %cst_1 : f32 to vector<16x1xf32>
    %5 = arith.mulf %3, %4 : vector<16x1xf32>
    %cst_2 = arith.constant 9.99999974E-6 : f32
    %6 = vector.broadcast %cst_2 : f32 to vector<16x1xf32>
    %7 = arith.addf %5, %6 : vector<16x1xf32>
    %8 = math.rsqrt %7 : vector<16x1xf32>
    %c0_3 = arith.constant 0 : index
    %c0_4 = arith.constant 0 : index
    %9 = vector.load %arg2[%c0_3, %c0_4] : memref<1x32xf32, #tpu.memory_space<vmem>>, vector<1x32xf32>
    %10 = vector.broadcast %8 : vector<16x1xf32> to vector<16x32xf32>
    %11 = vector.broadcast %9 : vector<1x32xf32> to vector<16x32xf32>
    %12 = arith.mulf %10, %11 : vector<16x32xf32>
    %13 = arith.mulf %0, %12 : vector<16x32xf32>
    %c0_5 = arith.constant 0 : index
    %c0_6 = arith.constant 0 : index
    %14 = vector.load %arg3[%c0_5, %c0_6] : memref<16x32xf32, #tpu.memory_space<vmem>>, vector<16x32xf32>
    tpu.vector_store %arg3[%c0_5, %c0_6], %13 {strides = array<i32>} : memref<16x32xf32, #tpu.memory_space<vmem>>, vector<16x32xf32>,
    return
  }
  func.func @transform_0(%arg0: i32) -> (i32, i32) {
    %c0_i32 = arith.constant 0 : i32
    %c0_i32_0 = arith.constant 0 : i32
    return %arg0, %c0_i32 : i32, i32
  }
  func.func @transform_1(%arg0: i32) -> (i32, i32) {
    %c0_i32 = arith.constant 0 : i32
    %c0_i32_0 = arith.constant 0 : i32
    %c0_i32_1 = arith.constant 0 : i32
    return %c0_i32, %c0_i32_0 : i32, i32
  }
  func.func @transform_2(%arg0: i32) -> (i32, i32) {
    %c0_i32 = arith.constant 0 : i32
    %c0_i32_0 = arith.constant 0 : i32
    return %arg0, %c0_i32 : i32, i32
  }
}

</mosaic_0001>

<llo_original>
// kernel: tpu_custom_call.1
$region0: #{tpu_custom_call.1}
  #allocation0 [shape = 'u32[]', space=smem, size = 0x4, offset = 0x4, fixed_abs, tag = 'smem constant byte address 0x4 - core index']
  #allocation1 [shape = 'u32[72,128]{1,0:T(1,128)}', space=vmem, size = 0x9000, scoped, tag = 'internal scratch']
  %s0 = inlined_call_operand.hbm [shape: f32[16,32], index: 0, kind: input, shape index: {}]
  %s1 = inlined_call_operand.hbm [shape: f32[1,32], index: 1, kind: input, shape index: {}]
  %s2 = inlined_call_operand.hbm [shape: f32[16,32], index: 2, kind: output, shape index: {}]
  %s3 = sld [smem:[#allocation0]]
  $region26: #{tpu_custom_call.1} parent=0
    _
  %s5 = ssub.s32 1, %s3
  %s6 = scalar_select 0, %s5, %s3
  $region1: #{tpu_custom_call.1} parent=0
    #allocation2 [shape = 'u8[8192]{0}', space=vmem, size = 0x2000, scoped, tag = 'input window, operand 0, single buffered']
    #allocation3 [shape = 's32[1]{0}', space=sflag, size = 0x4, scoped, tag = 'scoped memory for tpu_custom_call.1']
    #allocation4 [shape = 's32[1]{0}', space=sflag, size = 0x4, scoped, tag = 'scoped memory for tpu_custom_call.1']
    #allocation5 [shape = 'u8[512]{0}', space=vmem, size = 0x400, scoped, tag = 'input window, operand 1, single buffered']
    #allocation6 [shape = 's32[1]{0}', space=sflag, size = 0x4, scoped, tag = 'scoped memory for tpu_custom_call.1']
    #allocation7 [shape = 'u8[8192]{0}', space=vmem, size = 0x2000, scoped, tag = 'output window, operand 0, single buffered']
    %7 = vsyncpa [#allocation3], 0
    %8 = vsyncpa [#allocation6], 0
    %9 = vsyncpa [#allocation4], 0
    // Predicated region
    $region2: #{tpu_custom_call.1} parent=1 // pred_check
      _
    $region3: #{tpu_custom_call.1} parent=1 // pred_check_branch
      %11 = sbr.rel (0) target = $region5
    $region4: #{tpu_custom_call.1} parent=1 // pred_region
      %13 = vsyncadd [#allocation3], 0
      %s14 = sshll.u32 %s0, 4
      %s15 = int_to_ptr.hbm [resolvable:$true] %s14
      %s16 = sshll.u32 [#allocation2], 4
      %s17 = int_to_ptr.vmem [resolvable:$true] %s16
      %22 = dma.hbm_to_vmem [thread:$0]  %s15, 256, %s17, [#allocation3], 128, 128, 8
    $region5: #{tpu_custom_call.1} parent=1 // pred_fallthru
      _
    // Predicated region
    $region6: #{tpu_custom_call.1} parent=1 // pred_check
      _
    $region7: #{tpu_custom_call.1} parent=1 // pred_check_branch
      %24 = sbr.rel (0) target = $region9
    $region8: #{tpu_custom_call.1} parent=1 // pred_region
      %26 = vsyncadd [#allocation6], 0
      %s28 = sshll.u32 %s1, 4
      %s29 = int_to_ptr.hbm [resolvable:$true] %s28
      %s30 = sshll.u32 [#allocation5], 4
      %s31 = int_to_ptr.vmem [resolvable:$true] %s30
      %33 = dma.hbm_to_vmem [thread:$0]  %s29, 16, %s31, [#allocation6]
    $region9: #{tpu_custom_call.1} parent=1 // pred_fallthru
      _
    // Predicated region
    $region10: #{tpu_custom_call.1} parent=1 // pred_check
      _
    $region11: #{tpu_custom_call.1} parent=1 // pred_check_branch
      %35 = sbr.rel (0) target = $region13
    $region12: #{tpu_custom_call.1} parent=1 // pred_region
      %37 = dma.done [#allocation3], 256
    $region13: #{tpu_custom_call.1} parent=1 // pred_fallthru
      _
    // Predicated region
    $region14: #{tpu_custom_call.1} parent=1 // pred_check
      _
    $region15: #{tpu_custom_call.1} parent=1 // pred_check_branch
      %39 = sbr.rel (0) target = $region17
    $region16: #{tpu_custom_call.1} parent=1 // pred_region
      %41 = dma.done [#allocation6], 16
    $region17: #{tpu_custom_call.1} parent=1 // pred_fallthru
      _
    %v42 = vld [vmem:[#allocation2] sm:$0xff]
    %v43 = vld [vmem:[#allocation2 + $0x8] sm:$0xff]
    %v44 = vmul.f32 %v42, %v42
    %v45 = vmul.f32 %v43, %v43
    %vm46 = vcmask 261120
    %v47 = vsel %vm46, %v44, 0.0
    %48 = vadd.xlane.f32.xlu0 %v47
    %v49 = vpop.xlane.xlu0 %48
    %v50 = vsel %vm46, %v45, 0.0
    %51 = vadd.xlane.f32.xlu0 %v50
    %v52 = vpop.xlane.xlu0 %51
    %v53 = vmul.f32 %v49, 0.03125
    %v54 = vmul.f32 %v52, 0.03125
    %v55 = vadd.f32 %v53, 1e-05
    %v56 = vadd.f32 %v54, 1e-05
    %v57 = vrsqrt.pop %v55
    %v58 = vmul.f32 %v57, %v55
    %v59 = vmul.f32 %v58, %v57
    %v60 = vmul.f32 0.5, %v59
    %v61 = vsub.f32 1.5, %v60
    %v62 = vmul.f32 %v57, %v61
    %vm63 = vweird.f32 %v55
    %vm64 = vweird.f32 %v57
    %vm65 = vmor %vm63, %vm64
    %v66 = vsel %vm65, %v57, %v62
    %v67 = vrsqrt.pop %v56
    %v68 = vmul.f32 %v67, %v56
    %v69 = vmul.f32 %v68, %v67
    %v70 = vmul.f32 0.5, %v69
    %v71 = vsub.f32 1.5, %v70
    %v72 = vmul.f32 %v67, %v71
    %vm73 = vweird.f32 %v56
    %vm74 = vweird.f32 %v67
    %vm75 = vmor %vm73, %vm74
    %v76 = vsel %vm75, %v67, %v72
    %v77 = vld [vmem:[#allocation5] sm:$0x1]
    %v79 = vperm.slane %v77, 0
    %v81 = vmul.f32 %v66, %v79
    %v82 = vmul.f32 %v76, %v79
    %v83 = vmul.f32 %v42, %v81
    %v84 = vmul.f32 %v43, %v82
    %85 = vst.msk [vmem:[#allocation7] sm:$0xff] %vm46, %v83
    %86 = vst.msk [vmem:[#allocation7 + $0x8] sm:$0xff] %vm46, %v84
    // Predicated region
    $region18: #{tpu_custom_call.1} parent=1 // pred_check
      _
    $region19: #{tpu_custom_call.1} parent=1 // pred_check_branch
      %88 = sbr.rel (0) target = $region21
    $region20: #{tpu_custom_call.1} parent=1 // pred_region
      %90 = vsyncadd [#allocation4], 0
      %s91 = sshll.u32 [#allocation7], 4
      %s92 = int_to_ptr.vmem [resolvable:$true] %s91
      %s93 = sshll.u32 %s2, 4
      %s94 = int_to_ptr.hbm [resolvable:$true] %s93
      %99 = dma.vmem_to_hbm [thread:$0]  %s92, 256, %s94, [#allocation4], 128, 128, 8
    $region21: #{tpu_custom_call.1} parent=1 // pred_fallthru
      _
    // Predicated region
    $region22: #{tpu_custom_call.1} parent=1 // pred_check
      _
    $region23: #{tpu_custom_call.1} parent=1 // pred_check_branch
      %101 = sbr.rel (0) target = $region25
    $region24: #{tpu_custom_call.1} parent=1 // pred_region
      %103 = dma.done [#allocation4], 256
    $region25: #{tpu_custom_call.1} parent=1 // pred_fallthru
      _
    %104 = vsyncpa [#allocation3], 1
    %105 = vsyncpa [#allocation6], 1
    %106 = vsyncpa [#allocation4], 1

</llo_original>
